<compile_context>
chip_gen: v7x
topology: tpu7x:2x2x1
jax: 0.10.0
libtpu: 0.0.40
codegen_flags: <defaults>
</compile_context>

<pallas_src>
import math

import jax
import jax.numpy as jnp
from jax.experimental import pallas as pl
from jax.experimental.pallas import tpu as pltpu

_LANE = 128
_SUBLANE = 8


# -----------------------------------------------------------------------------
# Kernels
# -----------------------------------------------------------------------------
def _gwl_kernel_bias(x_ref, w_ref, b_ref, o_ref, acc_ref):
    # x_ref: (TB, TC, TD)  w_ref: (1, TC, TD)  b_ref: (1, TC)
    # o_ref: (TB, TC)      acc_ref: (TB, TC) float32 scratch
    d = pl.program_id(2)

    @pl.when(d == 0)
    def _():
        acc_ref[...] = jnp.zeros_like(acc_ref)

    x = x_ref[...].astype(jnp.float32)
    w = w_ref[...].astype(jnp.float32)
    acc_ref[...] += jnp.sum(x * w, axis=-1)          # VPU multiply + D-reduce

    @pl.when(d == pl.num_programs(2) - 1)
    def _():
        o_ref[...] = (acc_ref[...] + b_ref[...].astype(jnp.float32)).astype(o_ref.dtype)


def _gwl_kernel_nobias(x_ref, w_ref, o_ref, acc_ref):
    d = pl.program_id(2)

    @pl.when(d == 0)
    def _():
        acc_ref[...] = jnp.zeros_like(acc_ref)

    x = x_ref[...].astype(jnp.float32)
    w = w_ref[...].astype(jnp.float32)
    acc_ref[...] += jnp.sum(x * w, axis=-1)

    @pl.when(d == pl.num_programs(2) - 1)
    def _():
        o_ref[...] = acc_ref[...].astype(o_ref.dtype)


# -----------------------------------------------------------------------------
# Tile selection
# -----------------------------------------------------------------------------
def _pick_tile(dim, base, cap):
    """Largest t <= cap with t % base == 0 and dim % t == 0; full dim otherwise."""
    if dim <= base or dim % base != 0:
        return dim
    cap = max(base, (cap // base) * base)
    t = min(cap, (dim // base) * base)
    while t >= base:
        if dim % t == 0:
            return t
        t -= base
    return dim


def _choose_tiles(B, C, D, itemsize, budget_bytes=4 << 20):
    """Pick (TB, TC, TD): x tile ~<= 4 MiB (double-buffered, fits the scoped
    VMEM default on all of v5e/v6e/v7x), lane-dense output tile when C allows,
    and all tiles respect the (8, 128) layout constraints."""
    TD = _pick_tile(D, _LANE, 1024)
    tc_cap = max(_LANE, budget_bytes // (itemsize * _SUBLANE * TD))
    TC = _pick_tile(C, _LANE, tc_cap)
    # If C was not 128-divisible we were forced to take the full C; claw back
    # VMEM by shrinking the D tile (stays a multiple of 128 and divides D).
    while itemsize * _SUBLANE * TC * TD > budget_bytes and TD % (2 * _LANE) == 0:
        TD //= 2
    tb_cap = max(_SUBLANE, budget_bytes // (itemsize * TC * TD))
    TB = _pick_tile(B, _SUBLANE, tb_cap)
    return TB, TC, TD


# -----------------------------------------------------------------------------
# Wrapper
# -----------------------------------------------------------------------------
def group_wise_linear(x, w, b=None, *, force_pallas=False):
    """x: (B, C, D), w: (1, C, D) or (C, D), b: (1, C)/(C,)/None -> (B, C)."""
    B, C, D = x.shape
    w3 = w.reshape(1, C, D)
    b2 = None if b is None else b.reshape(1, C)

    # Tiny problems: per-grid-step / launch overhead dominates -> let XLA fuse.
    if not force_pallas and B * C * D * x.dtype.itemsize < (1 << 20):
        out = jnp.einsum("bcd,cd->bc", x.astype(jnp.float32),
                         w3[0].astype(jnp.float32))
        if b2 is not None:
            out = out + b2.astype(jnp.float32)
        return out.astype(x.dtype)

    TB, TC, TD = _choose_tiles(B, C, D, x.dtype.itemsize)
    grid = (C // TC, B // TB, D // TD)   # c outer, b middle, d (reduction) inner

    x_spec = pl.BlockSpec((TB, TC, TD), lambda c, bb, d: (bb, c, d))
    # w / bias block index is constant over the inner batch sweep (when D fits
    # in one tile), so the weights stay resident in VMEM across the batch loop.
    w_spec = pl.BlockSpec((1, TC, TD), lambda c, bb, d: (0, c, d))
    o_spec = pl.BlockSpec((TB, TC), lambda c, bb, d: (bb, c))

    compiler_params = pltpu.CompilerParams(
        dimension_semantics=("parallel", "parallel", "arbitrary"),
        vmem_limit_bytes=48 * 1024 * 1024,   # headroom on v5e (16 MiB default)
    )
    out_shape = jax.ShapeDtypeStruct((B, C), x.dtype)
    scratch = [pltpu.VMEM((TB, TC), jnp.float32)]

    if b2 is not None:
        b_spec = pl.BlockSpec((1, TC), lambda c, bb, d: (0, c))
        return pl.pallas_call(
            _gwl_kernel_bias,
            out_shape=out_shape,
            grid_spec=pltpu.PrefetchScalarGridSpec(
                num_scalar_prefetch=0,
                grid=grid,
                in_specs=[x_spec, w_spec, b_spec],
                out_specs=o_spec,
                scratch_shapes=scratch),
            compiler_params=compiler_params,
        )(x, w3, b2)

    return pl.pallas_call(
        _gwl_kernel_nobias,
        out_shape=out_shape,
        grid_spec=pltpu.PrefetchScalarGridSpec(
            num_scalar_prefetch=0,
            grid=grid,
            in_specs=[x_spec, w_spec],
            out_specs=o_spec,
            scratch_shapes=scratch),
        compiler_params=compiler_params,
    )(x, w3)


def init_params(key, num_class, hidden_dim, bias=True, dtype=jnp.float32):
    """Functional re-implementation of GroupWiseLinear.reset_parameters."""
    stdv = 1.0 / math.sqrt(hidden_dim)
    kw, kb = jax.random.split(key)
    w = jax.random.uniform(
        kw, (1, num_class, hidden_dim), dtype=dtype, minval=-stdv, maxval=stdv)
    b = None
    if bias:
        b = jax.random.uniform(
            kb, (1, num_class), dtype=dtype, minval=-stdv, maxval=stdv)
    return w, b


if __name__ == "__main__":
    key = jax.random.PRNGKey(0)
    k_x, k_p, k_x2, k_p2 = jax.random.split(key, 4)

    # Small demo shape consistent with the module: batch=2, num_class=8, hidden_dim=32.
    B, num_class, hidden_dim = 2, 8, 32
    x = jax.random.normal(k_x, (B, num_class, hidden_dim), dtype=jnp.float32)
    w, b = init_params(k_p, num_class, hidden_dim, bias=True)

    out = jax.block_until_ready(group_wise_linear(x, w, b, force_pallas=True))
    ref = jnp.sum(w * x, axis=-1) + b
    assert out.shape == (B, num_class)
    assert jnp.allclose(out, ref, atol=1e-5, rtol=1e-5)

    # A second (still small) shape that exercises the tiled multi-step grid
    # (grid=(1, 2, 1): lane-dense 256-wide output tiles, w resident across B).
    B2, C2, D2 = 16, 256, 512
    x2 = jax.random.normal(k_x2, (B2, C2, D2), dtype=jnp.float32)
    w2, b2 = init_params(k_p2, C2, D2, bias=True)
    out2 = jax.block_until_ready(group_wise_linear(x2, w2, b2, force_pallas=True))
    ref2 = jnp.sum(w2 * x2, axis=-1) + b2
    assert jnp.allclose(out2, ref2, atol=1e-4, rtol=1e-4)

    # No-bias path.
    out3 = jax.block_until_ready(group_wise_linear(x, w, None, force_pallas=True))
    assert jnp.allclose(out3, jnp.sum(w * x, axis=-1), atol=1e-5, rtol=1e-5)

    print("KERNEL_OK")
</pallas_src>

<mosaic_0001>
module attributes {stable_mosaic.version = 11 : i64} {
  func.func @_gwl_kernel_bias(%arg0: i32, %arg1: i32, %arg2: i32, %arg3: memref<2x8x32xf32, #tpu.memory_space<vmem>>, %arg4: memref<1x8x32xf32, #tpu.memory_space<vmem>>, %arg5: memref<1x8xf32, #tpu.memory_space<vmem>>, %arg6: memref<2x8xf32, #tpu.memory_space<vmem>>, %arg7: memref<2x8xf32, #tpu.memory_space<vmem>>) attributes {dimension_semantics = [#tpu.dimension_semantics<parallel>, #tpu.dimension_semantics<parallel>, #tpu.dimension_semantics<arbitrary>], iteration_bounds = array<i64: 1, 1, 1>, scalar_prefetch = 0 : i64, scratch_operands = 1 : i64, tpu.core_type = #tpu.core_type<tc>, window_params = [{transform_indices = @transform_0, window_bounds = array<i64: 2, 8, 32>}, {transform_indices = @transform_1, window_bounds = array<i64: 1, 8, 32>}, {transform_indices = @transform_2, window_bounds = array<i64: 1, 8>}, {transform_indices = @transform_3, window_bounds = array<i64: 2, 8>}]} {
    %c0_i32 = arith.constant 0 : i32
    %0 = arith.cmpi eq, %arg2, %c0_i32 : i32
    %1 = arith.extui %0 : i1 to i32
    %c0_i32_0 = arith.constant 0 : i32
    %2 = arith.cmpi ne, %1, %c0_i32_0 : i32
    scf.if %2 {
      %cst_12 = arith.constant 0.000000e+00 : f32
      %14 = vector.broadcast %cst_12 : f32 to vector<2x8xf32>
      %c0_13 = arith.constant 0 : index
      %c0_14 = arith.constant 0 : index
      %15 = vector.load %arg7[%c0_13, %c0_14] : memref<2x8xf32, #tpu.memory_space<vmem>>, vector<2x8xf32>
      tpu.vector_store %arg7[%c0_13, %c0_14], %14 {strides = array<i32>} : memref<2x8xf32, #tpu.memory_space<vmem>>, vector<2x8xf32>,
    } else {
    }
    %c0 = arith.constant 0 : index
    %c0_1 = arith.constant 0 : index
    %c0_2 = arith.constant 0 : index
    %3 = vector.load %arg3[%c0, %c0_1, %c0_2] : memref<2x8x32xf32, #tpu.memory_space<vmem>>, vector<2x8x32xf32>
    %c0_3 = arith.constant 0 : index
    %c0_4 = arith.constant 0 : index
    %c0_5 = arith.constant 0 : index
    %4 = vector.load %arg4[%c0_3, %c0_4, %c0_5] : memref<1x8x32xf32, #tpu.memory_space<vmem>>, vector<1x8x32xf32>
    %c0_6 = arith.constant 0 : index
    %c0_7 = arith.constant 0 : index
    %5 = vector.load %arg7[%c0_6, %c0_7] : memref<2x8xf32, #tpu.memory_space<vmem>>, vector<2x8xf32>
    %6 = vector.broadcast %4 : vector<1x8x32xf32> to vector<2x8x32xf32>
    %7 = arith.mulf %3, %6 : vector<2x8x32xf32>
    %cst = arith.constant dense<0.000000e+00> : vector<2x8xf32>
    %8 = vector.multi_reduction <add>, %7, %cst [2] : vector<2x8x32xf32> to vector<2x8xf32>
    %9 = arith.addf %5, %8 : vector<2x8xf32>
    %c0_8 = arith.constant 0 : index
    %c0_9 = arith.constant 0 : index
    %10 = vector.load %arg7[%c0_8, %c0_9] : memref<2x8xf32, #tpu.memory_space<vmem>>, vector<2x8xf32>
    tpu.vector_store %arg7[%c0_8, %c0_9], %9 {strides = array<i32>} : memref<2x8xf32, #tpu.memory_space<vmem>>, vector<2x8xf32>,
    %c0_i32_10 = arith.constant 0 : i32
    %11 = arith.cmpi eq, %arg2, %c0_i32_10 : i32
    %12 = arith.extui %11 : i1 to i32
    %c0_i32_11 = arith.constant 0 : i32
    %13 = arith.cmpi ne, %12, %c0_i32_11 : i32
    scf.if %13 {
      %c0_12 = arith.constant 0 : index
      %c0_13 = arith.constant 0 : index
      %14 = vector.load %arg7[%c0_12, %c0_13] : memref<2x8xf32, #tpu.memory_space<vmem>>, vector<2x8xf32>
      %c0_14 = arith.constant 0 : index
      %c0_15 = arith.constant 0 : index
      %15 = vector.load %arg5[%c0_14, %c0_15] : memref<1x8xf32, #tpu.memory_space<vmem>>, vector<1x8xf32>
      %16 = vector.broadcast %15 : vector<1x8xf32> to vector<2x8xf32>
      %17 = arith.addf %14, %16 : vector<2x8xf32>
      %c0_16 = arith.constant 0 : index
      %c0_17 = arith.constant 0 : index
      %18 = vector.load %arg6[%c0_16, %c0_17] : memref<2x8xf32, #tpu.memory_space<vmem>>, vector<2x8xf32>
      tpu.vector_store %arg6[%c0_16, %c0_17], %17 {strides = array<i32>} : memref<2x8xf32, #tpu.memory_space<vmem>>, vector<2x8xf32>,
    } else {
    }
    return
  }
  func.func @transform_0(%arg0: i32, %arg1: i32, %arg2: i32) -> (i32, i32, i32) {
    %c0_i32 = arith.constant 0 : i32
    return %arg1, %arg0, %arg2 : i32, i32, i32
  }
  func.func @transform_1(%arg0: i32, %arg1: i32, %arg2: i32) -> (i32, i32, i32) {
    %c0_i32 = arith.constant 0 : i32
    %c0_i32_0 = arith.constant 0 : i32
    return %c0_i32, %arg0, %arg2 : i32, i32, i32
  }
  func.func @transform_2(%arg0: i32, %arg1: i32, %arg2: i32) -> (i32, i32) {
    %c0_i32 = arith.constant 0 : i32
    %c0_i32_0 = arith.constant 0 : i32
    return %c0_i32, %arg0 : i32, i32
  }
  func.func @transform_3(%arg0: i32, %arg1: i32, %arg2: i32) -> (i32, i32) {
    %c0_i32 = arith.constant 0 : i32
    return %arg1, %arg0 : i32, i32
  }
}

</mosaic_0001>

<llo_original>
// kernel: tpu_custom_call.1
$region0: #{tpu_custom_call.1}
  #allocation0 [shape = 'u32[]', space=smem, size = 0x4, offset = 0x4, fixed_abs, tag = 'smem constant byte address 0x4 - core index']
  #allocation1 [shape = 'u32[144,128]{1,0:T(1,128)}', space=vmem, size = 0x12000, scoped, tag = 'internal scratch']
  #allocation2 [shape = 'f32[2,8]{1,0:T(2,128)}', space=vmem, size = 0x400, scoped, tag = 'scratch operand']
  %s0 = inlined_call_operand.hbm [shape: f32[2,8,32], index: 0, kind: input, shape index: {}]
  %s1 = inlined_call_operand.hbm [shape: f32[1,8,32], index: 1, kind: input, shape index: {}]
  %s2 = inlined_call_operand.vmem [shape: f32[1,8], index: 2, kind: input, shape index: {}]
  %s3 = inlined_call_operand.hbm [shape: f32[2,8], index: 3, kind: output, shape index: {}]
  %s4 = sld [smem:[#allocation0]]
  $region38: #{tpu_custom_call.1} parent=0
    _
  %s6 = ssub.s32 1, %s4
  %s7 = scalar_select 0, %s6, %s4
  $region1: #{tpu_custom_call.1} parent=0
    #allocation3 [shape = 'u8[8192]{0}', space=vmem, size = 0x2000, scoped, tag = 'input window, operand 0, single buffered']
    #allocation4 [shape = 's32[1]{0}', space=sflag, size = 0x4, scoped, tag = 'scoped memory for tpu_custom_call.1']
    #allocation5 [shape = 's32[1]{0}', space=sflag, size = 0x4, scoped, tag = 'scoped memory for tpu_custom_call.1']
    #allocation6 [shape = 'u8[4096]{0}', space=vmem, size = 0x1000, scoped, tag = 'input window, operand 1, single buffered']
    #allocation7 [shape = 's32[1]{0}', space=sflag, size = 0x4, scoped, tag = 'scoped memory for tpu_custom_call.1']
    #allocation8 [shape = 'u8[1024]{0}', space=vmem, size = 0x400, scoped, tag = 'output window, operand 0, single buffered']
    %8 = vsyncpa [#allocation4], 0
    %9 = vsyncpa [#allocation7], 0
    %10 = vsyncpa [#allocation5], 0
    // Predicated region
    $region2: #{tpu_custom_call.1} parent=1 // pred_check
      _
    $region3: #{tpu_custom_call.1} parent=1 // pred_check_branch
      %12 = sbr.rel (0) target = $region5
    $region4: #{tpu_custom_call.1} parent=1 // pred_region
      %s14 = ssub.s32 256, 256
      %15 = vsyncadd [#allocation4], %s14
      %s16 = sshll.u32 [#allocation3], 4
      %s17 = int_to_ptr.vmem [resolvable:$true] %s16
      %22 = dma.hbm_to_vmem [thread:$0]  %s0, 256, %s17, [#allocation4], 128, 128, 8
    $region5: #{tpu_custom_call.1} parent=1 // pred_fallthru
      _
    // Predicated region
    $region6: #{tpu_custom_call.1} parent=1 // pred_check
      _
    $region7: #{tpu_custom_call.1} parent=1 // pred_check_branch
      %24 = sbr.rel (0) target = $region9
    $region8: #{tpu_custom_call.1} parent=1 // pred_region
      %s26 = ssub.s32 128, 128
      %27 = vsyncadd [#allocation7], %s26
      %s29 = sshll.u32 [#allocation6], 4
      %s30 = int_to_ptr.vmem [resolvable:$true] %s29
      %32 = dma.hbm_to_vmem [thread:$0]  %s1, 128, %s30, [#allocation7]
    $region9: #{tpu_custom_call.1} parent=1 // pred_fallthru
      _
    // Predicated region
    $region10: #{tpu_custom_call.1} parent=1 // pred_check
      _
    $region11: #{tpu_custom_call.1} parent=1 // pred_check_branch
      %34 = sbr.rel (0) target = $region13
    $region12: #{tpu_custom_call.1} parent=1 // pred_region
      _
    $region13: #{tpu_custom_call.1} parent=1 // pred_fallthru
      _
    // Predicated region
    $region14: #{tpu_custom_call.1} parent=1 // pred_check
      _
    $region15: #{tpu_custom_call.1} parent=1 // pred_check_branch
      %36 = sbr.rel (0) target = $region17
    $region16: #{tpu_custom_call.1} parent=1 // pred_region
      %37 = dma.done [#allocation4], 256
    $region17: #{tpu_custom_call.1} parent=1 // pred_fallthru
      _
    // Predicated region
    $region18: #{tpu_custom_call.1} parent=1 // pred_check
      _
    $region19: #{tpu_custom_call.1} parent=1 // pred_check_branch
      %39 = sbr.rel (0) target = $region21
    $region20: #{tpu_custom_call.1} parent=1 // pred_region
      %40 = dma.done [#allocation7], 128
    $region21: #{tpu_custom_call.1} parent=1 // pred_fallthru
      _
    %p41 = scmp.eq.s32.totalorder 0, 0
    // Predicated region
    $region22: #{tpu_custom_call.1} parent=1 // pred_check
      %p42 = pneg %p41
    $region23: #{tpu_custom_call.1} parent=1 // pred_check_branch
      %44 = sbr.rel (%p42) target = $region25
    $region24: #{tpu_custom_call.1} parent=1 // pred_region
      %vm45 = vcmask 58368
      %46 = vst.msk [vmem:[#allocation2] sm:$0x3] %vm45, 0.0
    $region25: #{tpu_custom_call.1} parent=1 // pred_fallthru
      _
    %v47 = vld [vmem:[#allocation3] sm:$0xff]
    %v48 = vld [vmem:[#allocation3 + $0x8] sm:$0xff]
    %v49 = vld [vmem:[#allocation6] sm:$0xff]
    %v50 = vld [vmem:[#allocation2] sm:$0x3]
    %v51 = vmul.f32 %v47, %v49
    %v52 = vmul.f32 %v48, %v49
    %vm53 = vcmask 261120
    %v54 = vsel %vm53, %v51, 0.0
    %55 = vadd.xlane.f32.xlu0 %v54
    %v56 = vpop.xlane.xlu0 %55
    %v57 = vsel %vm53, %v52, 0.0
    %58 = vadd.xlane.f32.xlu0 %v57
    %v59 = vpop.xlane.xlu0 %58
    %v62 = vlaneseq
    %v63 = vand.u32 %v62, 127
    %v64 = vlaneseq
    %v65 = vshrl.u32 %v64, 7
    %v66 = vsub.s32 %v63, %v65
    %v67 = vrot.slane %v56, %v66
    %v68 = vlaneseq
    %v69 = vshrl.u32 %v68, 7
    %v70 = vsub.s32 %v63, %v69
    %v71 = vrot.slane %v59, %v70
    %vm72 = vcmask 1041409
    %v73 = vsel %vm72, %v71, %v67
    %v75 = vadd.f32 %v50, %v73
    %vm76 = vcmask 58368
    %77 = vst.msk [vmem:[#allocation2] sm:$0x3] %vm76, %v75
    // Predicated region
    $region26: #{tpu_custom_call.1} parent=1 // pred_check
      %p78 = pneg %p41
    $region27: #{tpu_custom_call.1} parent=1 // pred_check_branch
      %80 = sbr.rel (%p78) target = $region29
    $region28: #{tpu_custom_call.1} parent=1 // pred_region
      %v81 = vld [vmem:[#allocation2] sm:$0x3]
      %v82 = vld [vmem:[%s2] sm:$0x1]
      %v84 = vlaneseq
      %v85 = vshrl.u32 %v84, 7
      %v86 = vsub.s32 0, %v85
      %v87 = vrot.slane %v82, %v86
      %v89 = vadd.f32 %v81, %v87
      %90 = vst.msk [vmem:[#allocation8] sm:$0x3] %vm76, %v89
    $region29: #{tpu_custom_call.1} parent=1 // pred_fallthru
      _
    // Predicated region
    $region30: #{tpu_custom_call.1} parent=1 // pred_check
      _
    $region31: #{tpu_custom_call.1} parent=1 // pred_check_branch
      %92 = sbr.rel (0) target = $region33
    $region32: #{tpu_custom_call.1} parent=1 // pred_region
      %s94 = ssub.s32 32, 32
      %95 = vsyncadd [#allocation5], %s94
      %s97 = sshll.u32 [#allocation8], 4
      %s98 = int_to_ptr.vmem [resolvable:$true] %s97
      %100 = dma.vmem_to_hbm [thread:$0]  %s98, 32, %s3, [#allocation5]
    $region33: #{tpu_custom_call.1} parent=1 // pred_fallthru
      _
    // Predicated region
    $region34: #{tpu_custom_call.1} parent=1 // pred_check
      _
    $region35: #{tpu_custom_call.1} parent=1 // pred_check_branch
      %102 = sbr.rel (0) target = $region37
    $region36: #{tpu_custom_call.1} parent=1 // pred_region
      %103 = dma.done [#allocation5], 32
    $region37: #{tpu_custom_call.1} parent=1 // pred_fallthru
      _
    %104 = vsyncpa [#allocation4], 1
    %105 = vsyncpa [#allocation7], 1
    %106 = vsyncpa [#allocation5], 1

</llo_original>
